<compile_context>
chip_gen: v7x
topology: tpu7x:2x2x1
jax: 0.10.0
libtpu: 0.0.40
codegen_flags: <defaults>
</compile_context>

<pallas_src>
import functools
import math

import jax
import jax.numpy as jnp
from jax.experimental import pallas as pl
from jax.experimental.pallas import tpu as pltpu


# ---------------------------------------------------------------------------
# Helpers
# ---------------------------------------------------------------------------
def _vmem_budget_bytes():
    """~3/4 of physical VMEM; conservative fallback that fits every gen."""
    try:
        info = pltpu.get_tpu_info()
        phys = getattr(info, "vmem_capacity_bytes", None)
        if phys:
            return min(int(phys) * 3 // 4, 112 << 20)
    except Exception:
        pass
    return 48 << 20  # safe on v5e/v6e (128 MiB) and v7x (64 MiB)


def _row_align(itemsize):
    """Sublane-packing alignment: 8 rows for f32, 16 for bf16, 32 for int8."""
    return max(8, 32 // max(1, itemsize))


def _lane_pack_factor(c, hw):
    """k spatial rows packed into lanes so k*C is a multiple of 128."""
    k = 128 // math.gcd(c, 128)
    if k > 1 and hw % k != 0:
        # TODO(synk): pad the spatial dim (masked edge rows) so ragged HW can
        # still lane-pack; fall back to the unpacked (masked-store) layout.
        k = 1
    return k


def _pick_rows(hwp, kc, itemsize, align, target_bytes):
    """Largest divisor of hwp that is a multiple of `align` and keeps one
    (rows, kc) tile under ~target_bytes."""
    cap = max(align, target_bytes // max(1, kc * itemsize))
    best = None
    t = align
    limit = min(hwp, cap)
    while t <= limit:
        if hwp % t == 0:
            best = t
        t += align
    if best is None:
        # TODO(synk): ragged hwp (no aligned divisor) needs masked edge tiles
        # or padding; fall back to the full extent.
        best = hwp
    return best


# ---------------------------------------------------------------------------
# Resident kernel: whole (lane-packed) image per grid step (2x HBM traffic).
# ---------------------------------------------------------------------------
def _grn_resident_kernel(x_ref, gamma_ref, beta_ref, o_ref, *, eps, k, c, chunk):
    # x_ref: (HW//k, k*C) block for one batch element. gamma/beta: (1, C).
    hwp, kc = x_ref.shape
    nchunks = hwp // chunk

    # --- per-lane-slot sum of squares over the spatial axis, f32 acc -------
    if nchunks == 1:
        xf = x_ref[...].astype(jnp.float32)
        sq_packed = jnp.sum(xf * xf, axis=0, keepdims=True)           # (1, kc)
    else:
        # Chunked reduction: only a (chunk, kc) f32 accumulator is live, so no
        # full-image f32 temporaries (keeps big images resident on v7x).
        def body(i, acc):
            i0 = pl.multiple_of(i * chunk, chunk)
            xc = x_ref[pl.ds(i0, chunk), :].astype(jnp.float32)
            return acc + xc * xc

        acc = jax.lax.fori_loop(0, nchunks, body,
                                jnp.zeros((chunk, kc), jnp.float32),
                                unroll=(nchunks <= 8))
        sq_packed = jnp.sum(acc, axis=0, keepdims=True)                # (1, kc)

    # --- fold the k lane groups back onto the C channels -> (1, C) ---------
    sq = sq_packed[:, 0:c]
    for j in range(1, k):
        sq = sq + sq_packed[:, j * c:(j + 1) * c]

    gx = jnp.sqrt(sq)                                                  # (1, C)
    mean_gx = jnp.mean(gx, axis=-1, keepdims=True)                     # (1, 1)
    # approx=False: exact 1/x on a single element; approx EUP recip would
    # break tight tolerances and costs nothing here anyway.
    inv = pl.reciprocal(mean_gx + eps, approx=False)
    nx = gx * inv                                                      # (1, C)

    gamma = gamma_ref[...].astype(jnp.float32)
    beta = beta_ref[...].astype(jnp.float32)
    scale = gamma * nx + 1.0        # residual add folded into the scale

    # Re-pack (1, C) -> (1, k*C) to match the lane-packed tile, then apply in
    # the INPUT dtype (bf16 stays bf16 on v6e/v7x; f32 is exact).
    # NOTE(bf16): scale/beta get one extra rounding vs the f32 reference.
    scale_p = jnp.concatenate([scale] * k, axis=-1).astype(x_ref.dtype)
    beta_p = jnp.concatenate([beta] * k, axis=-1).astype(x_ref.dtype)

    o_ref[...] = (x_ref[...] * scale_p + beta_p).astype(o_ref.dtype)


# ---------------------------------------------------------------------------
# Tiled two-pass fallback (3x HBM traffic, VMEM-bounded, fully parallel grid).
# ---------------------------------------------------------------------------
def _grn_sqsum_kernel(x_ref, o_ref):
    # x_ref: (T, k*C) tile; o_ref: (1, k*C) f32 per-tile partial sum of squares.
    xf = x_ref[...].astype(jnp.float32)
    o_ref[...] = jnp.sum(xf * xf, axis=0, keepdims=True)


def _grn_apply_kernel(x_ref, scale_ref, beta_ref, o_ref):
    # out = x * (gamma*Nx + 1) + beta, applied in the input dtype.
    o_ref[...] = (x_ref[...] * scale_ref[...] + beta_ref[...]).astype(o_ref.dtype)


# ---------------------------------------------------------------------------
# Wrappers
# ---------------------------------------------------------------------------
def _grn_resident(x_p, gamma2, beta2, eps, k, c, chunk, vmem_limit, donate_x):
    n, hwp, kc = x_p.shape
    kernel = functools.partial(_grn_resident_kernel, eps=eps, k=k, c=c,
                               chunk=chunk)
    # TODO(synk): for very large single images a streaming (pl.ANY + manual
    # DMA into one resident VMEM copy) variant would roughly quadruple the
    # resident cutoff on v7x and overlap DMA with compute for N == 1.
    return pl.pallas_call(
        kernel,
        out_shape=jax.ShapeDtypeStruct((n, hwp, kc), x_p.dtype),
        grid=(n,),
        in_specs=[
            pl.BlockSpec((None, hwp, kc), lambda b: (b, 0, 0)),
            pl.BlockSpec((1, c), lambda b: (0, 0)),
            pl.BlockSpec((1, c), lambda b: (0, 0)),
        ],
        out_specs=pl.BlockSpec((None, hwp, kc), lambda b: (b, 0, 0)),
        input_output_aliases={0: 0} if donate_x else {},
        compiler_params=pltpu.CompilerParams(
            dimension_semantics=("parallel",),
            vmem_limit_bytes=int(vmem_limit),
        ),
    )(x_p, gamma2, beta2)


def _grn_tiled(x_p, gamma2, beta2, eps, k, c, t_rows, vmem_limit, donate_x):
    n, hwp, kc = x_p.shape
    num_t = hwp // t_rows
    dtype = x_p.dtype

    # --- pass 1: per-tile partial sums of squares (all grid axes parallel) --
    partials = pl.pallas_call(
        _grn_sqsum_kernel,
        out_shape=jax.ShapeDtypeStruct((n, num_t, 1, kc), jnp.float32),
        grid=(n, num_t),
        in_specs=[pl.BlockSpec((None, t_rows, kc), lambda b, t: (b, t, 0))],
        out_specs=pl.BlockSpec((None, None, 1, kc), lambda b, t: (b, t, 0, 0)),
        compiler_params=pltpu.CompilerParams(
            dimension_semantics=("parallel", "parallel"),
            vmem_limit_bytes=int(vmem_limit),
        ),
    )(x_p)

    # --- tiny finalize in plain JAX (a few KB): fold lane groups, Gx, Nx ----
    sq = partials.reshape(n, num_t, k, c).sum(axis=(1, 2))              # (N, C)
    gx = jnp.sqrt(sq)
    nx = gx / (jnp.mean(gx, axis=-1, keepdims=True) + eps)
    scale = gamma2.astype(jnp.float32) * nx + 1.0                       # (N, C)
    scale_p = jnp.tile(scale, (1, k))[:, None, :].astype(dtype)         # (N,1,kC)
    beta_p = jnp.tile(beta2.astype(jnp.float32), (1, k))[:, None, :].astype(dtype)

    # --- pass 2: apply; both axes parallel -> no idle TC for N == 1 on v7x --
    return pl.pallas_call(
        _grn_apply_kernel,
        out_shape=jax.ShapeDtypeStruct((n, hwp, kc), dtype),
        grid=(n, num_t),
        in_specs=[
            pl.BlockSpec((None, t_rows, kc), lambda b, t: (b, t, 0)),
            pl.BlockSpec((None, 1, kc), lambda b, t: (b, 0, 0)),
            pl.BlockSpec((None, 1, kc), lambda b, t: (0, 0, 0)),
        ],
        out_specs=pl.BlockSpec((None, t_rows, kc), lambda b, t: (b, t, 0)),
        input_output_aliases={0: 0} if donate_x else {},
        compiler_params=pltpu.CompilerParams(
            dimension_semantics=("parallel", "parallel"),
            vmem_limit_bytes=int(vmem_limit),
        ),
    )(x_p, scale_p, beta_p)


def grn(x, gamma, beta, eps=1e-6, *, force_tiled=False, tile_rows=None,
        reduce_chunk_rows=None, donate_x=False):
    """GRN forward. x: (N, H, W, C); gamma/beta broadcastable to (1,1,1,C)."""
    n, h, w, c = x.shape
    hw = h * w
    itemsize = jnp.dtype(x.dtype).itemsize
    align = _row_align(itemsize)

    # Lane-pack k spatial rows so the last (lane) dim is a multiple of 128:
    # (N, HW, C) -> (N, HW/k, k*C). Row-major metadata reshape, zero copies.
    k = _lane_pack_factor(c, hw)
    hwp, kc = hw // k, k * c
    x_p = x.reshape(n, hwp, kc)

    gamma2 = jnp.asarray(gamma).reshape(1, c)
    beta2 = jnp.asarray(beta).reshape(1, c)

    budget = _vmem_budget_bytes()
    block_bytes = hwp * kc * itemsize

    # f32 reduction chunk for the resident path (bounds in-kernel f32 temps).
    if reduce_chunk_rows is not None:
        chunk = int(reduce_chunk_rows)
        assert hwp % chunk == 0, "reduce_chunk_rows must divide HW // k"
    else:
        chunk = _pick_rows(hwp, kc, 4, align, 1 << 20)

    # Resident-path VMEM need: double-buffered in + out image blocks plus the
    # f32 reduction chunk and headroom (no full-image f32 temporaries).
    resident_need = 4 * block_bytes + 2 * chunk * kc * 4 + (1 << 20)

    if force_tiled or resident_need > budget:
        if tile_rows is None:
            target = max(2 << 20, min(8 << 20, budget // 12))
            t_rows = _pick_rows(hwp, kc, itemsize, align, target)
        else:
            t_rows = int(tile_rows)
            assert hwp % t_rows == 0, "tile_rows must divide HW // k"
        out_p = _grn_tiled(x_p, gamma2, beta2, eps, k, c, t_rows, budget,
                           donate_x)
    else:
        out_p = _grn_resident(x_p, gamma2, beta2, eps, k, c, chunk, budget,
                              donate_x)

    return out_p.reshape(n, h, w, c)


def grn_reference(x, gamma, beta, eps=1e-6):
    """Pure-JAX reference matching the PyTorch forward (f32 accumulation)."""
    xf = x.astype(jnp.float32)
    gx = jnp.sqrt(jnp.sum(xf * xf, axis=(1, 2), keepdims=True))   # (N,1,1,C)
    nx = gx / (jnp.mean(gx, axis=-1, keepdims=True) + eps)        # (N,1,1,C)
    out = gamma * (xf * nx) + beta + xf
    return out.astype(x.dtype)


if __name__ == "__main__":
    key = jax.random.PRNGKey(0)
    kx, kg, kb = jax.random.split(key, 3)

    # d_model = 48 is NOT a divisor of 128 -> exercises the gcd-based lane
    # packing (k = 128 // gcd(48, 128) = 8, packed last dim = 384).
    n, h, w, c = 2, 16, 16, 48

    x = jax.random.normal(kx, (n, h, w, c), dtype=jnp.float32)
    gamma = 1.0 + 0.1 * jax.random.normal(kg, (1, 1, 1, c), dtype=jnp.float32)
    beta = 0.1 * jax.random.normal(kb, (1, 1, 1, c), dtype=jnp.float32)

    ref = grn_reference(x, gamma, beta)

    # Resident (lane-packed) path — the default for small/medium images.
    out = jax.block_until_ready(grn(x, gamma, beta))
    assert out.shape == (n, h, w, c)
    assert jnp.allclose(out, ref, atol=1e-5, rtol=1e-5), "resident path mismatch"

    # Resident path with a forced small reduction chunk — exercises the
    # chunked fori_loop sum-of-squares used for large images (v7x cutoff).
    out_c = jax.block_until_ready(grn(x, gamma, beta, reduce_chunk_rows=8))
    assert jnp.allclose(out_c, ref, atol=1e-5, rtol=1e-5), "chunked reduce mismatch"

    # Two-pass tiled fallback (reduce partials -> finalize -> apply),
    # lane-packed and with both grid axes parallel.
    out_t = jax.block_until_ready(grn(x, gamma, beta, force_tiled=True,
                                      tile_rows=8))
    assert jnp.allclose(out_t, ref, atol=1e-5, rtol=1e-5), "tiled path mismatch"

    print("KERNEL_OK")
</pallas_src>

<mosaic_0001>
module attributes {stable_mosaic.version = 11 : i64} {
  func.func @_grn_resident_kernel(%arg0: i32, %arg1: memref<1x32x384xf32, #tpu.memory_space<vmem>>, %arg2: memref<1x48xf32, #tpu.memory_space<vmem>>, %arg3: memref<1x48xf32, #tpu.memory_space<vmem>>, %arg4: memref<1x32x384xf32, #tpu.memory_space<vmem>>) attributes {dimension_semantics = [#tpu.dimension_semantics<parallel>], iteration_bounds = array<i64: 2>, scalar_prefetch = 0 : i64, scratch_operands = 0 : i64, tpu.core_type = #tpu.core_type<tc>, window_params = [{transform_indices = @transform_0, window_bounds = array<i64: 1, 32, 384>}, {pipeline_mode = #tpu.pipeline_mode<synchronous>, transform_indices = @transform_1, window_bounds = array<i64: 1, 48>}, {pipeline_mode = #tpu.pipeline_mode<synchronous>, transform_indices = @transform_2, window_bounds = array<i64: 1, 48>}, {transform_indices = @transform_3, window_bounds = array<i64: 1, 32, 384>}]} {
    %c0 = arith.constant 0 : index
    %c0_0 = arith.constant 0 : index
    %c0_1 = arith.constant 0 : index
    %0 = vector.load %arg1[%c0, %c0_0, %c0_1] : memref<1x32x384xf32, #tpu.memory_space<vmem>>, vector<1x32x384xf32>
    %1 = vector.shape_cast %0 : vector<1x32x384xf32> to vector<32x384xf32>
    %2 = arith.mulf %1, %1 : vector<32x384xf32>
    %cst = arith.constant dense<0.000000e+00> : vector<384xf32>
    %3 = vector.multi_reduction <add>, %2, %cst [0] : vector<32x384xf32> to vector<384xf32>
    %4 = vector.shape_cast %3 : vector<384xf32> to vector<1x384xf32>
    %5 = vector.extract_strided_slice %4 {offsets = [0, 0], sizes = [1, 48], strides = [1, 1]} : vector<1x384xf32> to vector<1x48xf32>
    %6 = vector.extract_strided_slice %4 {offsets = [0, 48], sizes = [1, 48], strides = [1, 1]} : vector<1x384xf32> to vector<1x48xf32>
    %7 = arith.addf %5, %6 : vector<1x48xf32>
    %8 = vector.extract_strided_slice %4 {offsets = [0, 96], sizes = [1, 48], strides = [1, 1]} : vector<1x384xf32> to vector<1x48xf32>
    %9 = arith.addf %7, %8 : vector<1x48xf32>
    %10 = vector.extract_strided_slice %4 {offsets = [0, 144], sizes = [1, 48], strides = [1, 1]} : vector<1x384xf32> to vector<1x48xf32>
    %11 = arith.addf %9, %10 : vector<1x48xf32>
    %12 = vector.extract_strided_slice %4 {offsets = [0, 192], sizes = [1, 48], strides = [1, 1]} : vector<1x384xf32> to vector<1x48xf32>
    %13 = arith.addf %11, %12 : vector<1x48xf32>
    %14 = vector.extract_strided_slice %4 {offsets = [0, 240], sizes = [1, 48], strides = [1, 1]} : vector<1x384xf32> to vector<1x48xf32>
    %15 = arith.addf %13, %14 : vector<1x48xf32>
    %16 = vector.extract_strided_slice %4 {offsets = [0, 288], sizes = [1, 48], strides = [1, 1]} : vector<1x384xf32> to vector<1x48xf32>
    %17 = arith.addf %15, %16 : vector<1x48xf32>
    %18 = vector.extract_strided_slice %4 {offsets = [0, 336], sizes = [1, 48], strides = [1, 1]} : vector<1x384xf32> to vector<1x48xf32>
    %19 = arith.addf %17, %18 : vector<1x48xf32>
    %20 = math.sqrt %19 : vector<1x48xf32>
    %cst_2 = arith.constant dense<0.000000e+00> : vector<1xf32>
    %21 = vector.multi_reduction <add>, %20, %cst_2 [1] : vector<1x48xf32> to vector<1xf32>
    %22 = vector.shape_cast %21 : vector<1xf32> to vector<1x1xf32>
    %cst_3 = arith.constant 4.800000e+01 : f32
    %23 = vector.broadcast %cst_3 : f32 to vector<1x1xf32>
    %24 = arith.divf %22, %23 : vector<1x1xf32>
    %cst_4 = arith.constant 9.99999997E-7 : f32
    %25 = vector.broadcast %cst_4 : f32 to vector<1x1xf32>
    %26 = arith.addf %24, %25 : vector<1x1xf32>
    %27 = tpu.reciprocal %26 : vector<1x1xf32> -> vector<1x1xf32>
    %28 = vector.broadcast %27 : vector<1x1xf32> to vector<1x48xf32>
    %29 = arith.mulf %20, %28 : vector<1x48xf32>
    %c0_5 = arith.constant 0 : index
    %c0_6 = arith.constant 0 : index
    %30 = vector.load %arg2[%c0_5, %c0_6] : memref<1x48xf32, #tpu.memory_space<vmem>>, vector<1x48xf32>
    %c0_7 = arith.constant 0 : index
    %c0_8 = arith.constant 0 : index
    %31 = vector.load %arg3[%c0_7, %c0_8] : memref<1x48xf32, #tpu.memory_space<vmem>>, vector<1x48xf32>
    %32 = arith.mulf %30, %29 : vector<1x48xf32>
    %cst_9 = arith.constant 1.000000e+00 : f32
    %33 = vector.broadcast %cst_9 : f32 to vector<1x48xf32>
    %34 = arith.addf %32, %33 : vector<1x48xf32>
    %35 = tpu.concatenate %34, %34, %34, %34, %34, %34, %34, %34 in 1 : vector<1x48xf32>, vector<1x48xf32>, vector<1x48xf32>, vector<1x48xf32>, vector<1x48xf32>, vector<1x48xf32>, vector<1x48xf32>, vector<1x48xf32> -> vector<1x384xf32>
    %36 = tpu.concatenate %31, %31, %31, %31, %31, %31, %31, %31 in 1 : vector<1x48xf32>, vector<1x48xf32>, vector<1x48xf32>, vector<1x48xf32>, vector<1x48xf32>, vector<1x48xf32>, vector<1x48xf32>, vector<1x48xf32> -> vector<1x384xf32>
    %c0_10 = arith.constant 0 : index
    %c0_11 = arith.constant 0 : index
    %c0_12 = arith.constant 0 : index
    %37 = vector.load %arg1[%c0_10, %c0_11, %c0_12] : memref<1x32x384xf32, #tpu.memory_space<vmem>>, vector<1x32x384xf32>
    %38 = vector.shape_cast %37 : vector<1x32x384xf32> to vector<32x384xf32>
    %39 = vector.broadcast %35 : vector<1x384xf32> to vector<32x384xf32>
    %40 = arith.mulf %38, %39 : vector<32x384xf32>
    %41 = vector.broadcast %36 : vector<1x384xf32> to vector<32x384xf32>
    %42 = arith.addf %40, %41 : vector<32x384xf32>
    %c0_13 = arith.constant 0 : index
    %c0_14 = arith.constant 0 : index
    %c0_15 = arith.constant 0 : index
    %43 = vector.load %arg4[%c0_13, %c0_14, %c0_15] : memref<1x32x384xf32, #tpu.memory_space<vmem>>, vector<1x32x384xf32>
    %44 = vector.shape_cast %43 : vector<1x32x384xf32> to vector<32x384xf32>
    %45 = vector.shape_cast %42 : vector<32x384xf32> to vector<1x32x384xf32>
    tpu.vector_store %arg4[%c0_13, %c0_14, %c0_15], %45 {strides = array<i32>} : memref<1x32x384xf32, #tpu.memory_space<vmem>>, vector<1x32x384xf32>,
    return
  }
  func.func @transform_0(%arg0: i32) -> (i32, i32, i32) {
    %c0_i32 = arith.constant 0 : i32
    %c0_i32_0 = arith.constant 0 : i32
    %c0_i32_1 = arith.constant 0 : i32
    return %arg0, %c0_i32, %c0_i32_0 : i32, i32, i32
  }
  func.func @transform_1(%arg0: i32) -> (i32, i32) {
    %c0_i32 = arith.constant 0 : i32
    %c0_i32_0 = arith.constant 0 : i32
    %c0_i32_1 = arith.constant 0 : i32
    return %c0_i32, %c0_i32_0 : i32, i32
  }
  func.func @transform_2(%arg0: i32) -> (i32, i32) {
    %c0_i32 = arith.constant 0 : i32
    %c0_i32_0 = arith.constant 0 : i32
    %c0_i32_1 = arith.constant 0 : i32
    return %c0_i32, %c0_i32_0 : i32, i32
  }
  func.func @transform_3(%arg0: i32) -> (i32, i32, i32) {
    %c0_i32 = arith.constant 0 : i32
    %c0_i32_0 = arith.constant 0 : i32
    %c0_i32_1 = arith.constant 0 : i32
    return %arg0, %c0_i32, %c0_i32_0 : i32, i32, i32
  }
}

</mosaic_0001>

<llo_original>
// kernel: tpu_custom_call.1
$region0: #{tpu_custom_call.1}
  #allocation0 [shape = 'u32[]', space=smem, size = 0x4, offset = 0x4, fixed_abs, tag = 'smem constant byte address 0x4 - core index']
  #allocation1 [shape = 'u32[144,128]{1,0:T(1,128)}', space=vmem, size = 0x12000, scoped, tag = 'internal scratch']
  %s0 = inlined_call_operand.hbm [shape: f32[2,32,384], index: 0, kind: input, shape index: {}]
  %s1 = inlined_call_operand.vmem [shape: f32[1,48], index: 1, kind: input, shape index: {}]
  %s2 = inlined_call_operand.vmem [shape: f32[1,48], index: 2, kind: input, shape index: {}]
  %s3 = inlined_call_operand.hbm [shape: f32[2,32,384], index: 3, kind: output, shape index: {}]
  %s4 = sld [smem:[#allocation0]]
  $region49: #{tpu_custom_call.1} parent=0
    _
  %s6 = ssub.s32 1, %s4
  %s7 = scalar_select 0, %s6, %s4
  $region1: #{tpu_custom_call.1} parent=0
    #allocation2 [shape = 'u8[98304]{0}', space=vmem, size = 0x18000, scoped, tag = 'input window, operand 0']
    #allocation3 [shape = 's32[2]{0}', space=sflag, size = 0x8, scoped, tag = 'scoped memory for tpu_custom_call.1']
    #allocation4 [shape = 's32[2]{0}', space=sflag, size = 0x8, scoped, tag = 'scoped memory for tpu_custom_call.1']
    #allocation5 [shape = 'u8[98304]{0}', space=vmem, size = 0x18000, scoped, tag = 'output window, operand 0']
    %8 = vsyncpa [#allocation3], 0
    %s9 = scalar_lea.sflag [#allocation3], 1
    %10 = vsyncpa %s9, 0
    %11 = vsyncpa [#allocation4], 0
    %s12 = scalar_lea.sflag [#allocation4], 1
    %13 = vsyncpa %s12, 0
    loop: start=0, step=1, limit=4
    $region2: #{tpu_custom_call.1} parent=1 // loop_pre_header
      _
    $region3: #{tpu_custom_call.1} parent=1 // loop_header
      %s15 = sphi 0, %s19
      %p16 = scmp.ge.s32.totalorder %s15, 4
      %s25 = sphi 0, %s27
      %s28 = sphi 0, %s25
      %s29 = sphi 0, %s28
      %s45 = sphi 0, %s29
      %s49 = sphi 0, %s49
      %s51 = sphi 0, %s49
      %s52 = sphi 0, %s51
      %s66 = sphi 0, %s52
      %s70 = sphi 0, %s70
      %s72 = sphi 0, %s70
      %s73 = sphi 0, %s72
      %s87 = sphi 0, %s73
      %s93 = sphi 0, %s95
      %s96 = sphi 0, %s93
      %s97 = sphi 0, %s96
      %s113 = sphi 0, %s97
    $region4: #{tpu_custom_call.1} parent=1 // loop_header_branch
      %18 = sbr.rel (%p16) target = $region8
    $region5: #{tpu_custom_call.1} parent=1 // loop_body
      %s20 = ssub.s32 %s15, 1
      %s21 = ssub.s32 %s15, 2
      %s22 = sadd.s32 %s15, 1
      %s23 = ssub.s32 %s15, %s22
      %p24 = scmp.eq.s32.totalorder %s23, 0
      %s26 = sadd.s32 %s25, 1
      %s27 = scalar_select %p24, %s25, %s26
      %p30 = pneg %p24
      %p31 = scmp.eq.s32.totalorder %s15, 1
      %p32 = por %p30, %p31
      %p33 = scmp.ne.s32.totalorder %s25, %s28
      %p34 = scmp.eq.s32.totalorder %s15, 0
      %p35 = por %p33, %p34
      %p36 = scmp.ne.s32.totalorder %s25, %s28
      %p37 = scmp.eq.s32.totalorder %s20, 1
      %p38 = por %p36, %p37
      %p39 = scmp.ne.s32.totalorder %s28, %s29
      %p40 = scmp.eq.s32.totalorder %s20, 0
      %p41 = por %p39, %p40
      %p42 = scmp.ne.s32.totalorder %s28, %s29
      %p43 = scmp.eq.s32.totalorder %s21, 1
      %p44 = por %p42, %p43
      %p46 = scmp.ne.s32.totalorder %s29, %s45
      %p47 = scmp.eq.s32.totalorder %s21, 0
      %p48 = por %p46, %p47
      %s50 = sadd.s32 %s49, 1
      %p53 = scmp.eq.s32.totalorder %s15, 1
      %p54 = scmp.ne.s32.totalorder %s49, %s51
      %p55 = scmp.eq.s32.totalorder %s15, 0
      %p56 = por %p54, %p55
      %p57 = scmp.ne.s32.totalorder %s49, %s51
      %p58 = scmp.eq.s32.totalorder %s20, 1
      %p59 = por %p57, %p58
      %p60 = scmp.ne.s32.totalorder %s51, %s52
      %p61 = scmp.eq.s32.totalorder %s20, 0
      %p62 = por %p60, %p61
      %p63 = scmp.ne.s32.totalorder %s51, %s52
      %p64 = scmp.eq.s32.totalorder %s21, 1
      %p65 = por %p63, %p64
      %p67 = scmp.ne.s32.totalorder %s52, %s66
      %p68 = scmp.eq.s32.totalorder %s21, 0
      %p69 = por %p67, %p68
      %s71 = sadd.s32 %s70, 1
      %p74 = scmp.eq.s32.totalorder %s15, 1
      %p75 = scmp.ne.s32.totalorder %s70, %s72
      %p76 = scmp.eq.s32.totalorder %s15, 0
      %p77 = por %p75, %p76
      %p78 = scmp.ne.s32.totalorder %s70, %s72
      %p79 = scmp.eq.s32.totalorder %s20, 1
      %p80 = por %p78, %p79
      %p81 = scmp.ne.s32.totalorder %s72, %s73
      %p82 = scmp.eq.s32.totalorder %s20, 0
      %p83 = por %p81, %p82
      %p84 = scmp.ne.s32.totalorder %s72, %s73
      %p85 = scmp.eq.s32.totalorder %s21, 1
      %p86 = por %p84, %p85
      %p88 = scmp.ne.s32.totalorder %s73, %s87
      %p89 = scmp.eq.s32.totalorder %s21, 0
      %p90 = por %p88, %p89
      %s91 = ssub.s32 %s15, %s22
      %p92 = scmp.eq.s32.totalorder %s91, 0
      %s94 = sadd.s32 %s93, 1
      %s95 = scalar_select %p92, %s93, %s94
      %p98 = pneg %p92
      %p99 = scmp.eq.s32.totalorder %s15, 1
      %p100 = por %p98, %p99
      %p101 = scmp.ne.s32.totalorder %s93, %s96
      %p102 = scmp.eq.s32.totalorder %s15, 0
      %p103 = por %p101, %p102
      %p104 = scmp.ne.s32.totalorder %s93, %s96
      %p105 = scmp.eq.s32.totalorder %s20, 1
      %p106 = por %p104, %p105
      %p107 = scmp.ne.s32.totalorder %s96, %s97
      %p108 = scmp.eq.s32.totalorder %s20, 0
      %p109 = por %p107, %p108
      %p110 = scmp.ne.s32.totalorder %s96, %s97
      %p111 = scmp.eq.s32.totalorder %s21, 1
      %p112 = por %p110, %p111
      %p114 = scmp.ne.s32.totalorder %s97, %s113
      %p115 = scmp.eq.s32.totalorder %s21, 0
      %p116 = por %p114, %p115
      %p117 = scmp.le.s32.totalorder 1, %s15
      %p118 = scmp.lt.s32.totalorder %s15, 3
      %p119 = pnand %p117, %p118
      %p120 = pneg %p119
      // Predicated region
      $region9: #{tpu_custom_call.1} parent=5 // pred_check
        _
      $region10: #{tpu_custom_call.1} parent=5 // pred_check_branch
        %122 = sbr.rel (%p119) target = $region12
      $region11: #{tpu_custom_call.1} parent=5 // pred_region
        %s123 = ssub.s32 %s15, 1
        // Predicated region
        $region13: #{tpu_custom_call.1} parent=11 // pred_check
          %p124 = pneg %p62
        $region14: #{tpu_custom_call.1} parent=11 // pred_check_branch
          %126 = sbr.rel (%p124) target = $region16
        $region15: #{tpu_custom_call.1} parent=11 // pred_region
          _
        $region16: #{tpu_custom_call.1} parent=11 // pred_fallthru
          _
        // Predicated region
        $region17: #{tpu_custom_call.1} parent=11 // pred_check
          %p127 = pneg %p83
        $region18: #{tpu_custom_call.1} parent=11 // pred_check_branch
          %129 = sbr.rel (%p127) target = $region20
        $region19: #{tpu_custom_call.1} parent=11 // pred_region
          _
        $region20: #{tpu_custom_call.1} parent=11 // pred_fallthru
          _
      $region12: #{tpu_custom_call.1} parent=5 // pred_fallthru
        _
      %p130 = scmp.lt.s32.totalorder %s15, 2
      // Predicated region
      $region21: #{tpu_custom_call.1} parent=5 // pred_check
        %p131 = pneg %p130
      $region22: #{tpu_custom_call.1} parent=5 // pred_check_branch
        %133 = sbr.rel (%p131) target = $region24
      $region23: #{tpu_custom_call.1} parent=5 // pred_region
        // Predicated region
        $region25: #{tpu_custom_call.1} parent=23 // pred_check
          %p134 = pneg %p35
        $region26: #{tpu_custom_call.1} parent=23 // pred_check_branch
          %136 = sbr.rel (%p134) target = $region28
        $region27: #{tpu_custom_call.1} parent=23 // pred_region
          %s137 = sand.u32 %s25, 1
          %s138 = scalar_lea.sflag [#allocation3], %s137
          %s139 = sand.u32 %s25, 1
          %s140 = smul.addr %s139, 96
          %s141 = scalar_lea.vmem [#allocation2], %s140
          %s143 = ssub.s32 1536, 1536
          %144 = vsyncadd %s138, %s143
          %s145 = smul.addr %s15, 12
          %s146 = smul.addr %s145, 128
          %s147 = scalar_lea.hbm %s0, %s146
          %s148 = sshll.u32 %s141, 4
          %s149 = int_to_ptr.vmem [resolvable:$true] %s148
          %154 = dma.hbm_to_vmem [thread:$0]  %s147, 1536, %s149, %s138, 384, 384, 24
        $region28: #{tpu_custom_call.1} parent=23 // pred_fallthru
          _
      $region24: #{tpu_custom_call.1} parent=5 // pred_fallthru
        _
      %p155 = scmp.le.s32.totalorder 1, %s15
      %p156 = scmp.lt.s32.totalorder %s15, 3
      %p157 = pnand %p155, %p156
      %p158 = pneg %p157
      // Predicated region
      $region29: #{tpu_custom_call.1} parent=5 // pred_check
        _
      $region30: #{tpu_custom_call.1} parent=5 // pred_check_branch
        %160 = sbr.rel (%p157) target = $region32
      $region31: #{tpu_custom_call.1} parent=5 // pred_region
        %s161 = ssub.s32 %s15, 1
        %s162 = sand.u32 %s28, 1
        %s163 = scalar_lea.sflag [#allocation3], %s162
        %s164 = sand.u32 %s28, 1
        %s165 = smul.addr %s164, 96
        %s166 = scalar_lea.vmem [#allocation2], %s165
        // Predicated region
        $region33: #{tpu_custom_call.1} parent=31 // pred_check
          %p167 = pneg %p41
        $region34: #{tpu_custom_call.1} parent=31 // pred_check_branch
          %169 = sbr.rel (%p167) target = $region36
        $region35: #{tpu_custom_call.1} parent=31 // pred_region
          %170 = dma.done %s163, 1536
        $region36: #{tpu_custom_call.1} parent=31 // pred_fallthru
          _
        %s171 = sand.u32 %s28, 1
        %s172 = scalar_lea.sflag [#allocation3], %s171
        %s173 = sand.u32 %s28, 1
        %s174 = smul.addr %s173, 96
        %s175 = scalar_lea.vmem [#allocation2], %s174
        %p176 = pneg %p41
        %p177 = pneg %p38
        %p178 = pneg %p62
        %p179 = pneg %p59
        %p180 = pneg %p83
        %p181 = pneg %p80
        %p182 = pneg %p109
        %p183 = pneg %p106
        %s184 = sand.u32 %s96, 1
        %s185 = scalar_lea.sflag [#allocation4], %s184
        %s186 = sand.u32 %s96, 1
        %s187 = smul.addr %s186, 96
        %s188 = scalar_lea.vmem [#allocation5], %s187
        %v189 = vld [vmem:[%s166] sm:$0xff]
        %v190 = vld [vmem:[%s166 + $0x8] sm:$0xff]
        %v191 = vld [vmem:[%s166 + $0x10] sm:$0xff]
        %v192 = vld [vmem:[%s166 + $0x18] sm:$0xff]
        %v193 = vld [vmem:[%s166 + $0x20] sm:$0xff]
        %v194 = vld [vmem:[%s166 + $0x28] sm:$0xff]
        %v195 = vld [vmem:[%s166 + $0x30] sm:$0xff]
        %v196 = vld [vmem:[%s166 + $0x38] sm:$0xff]
        %v197 = vld [vmem:[%s166 + $0x40] sm:$0xff]
        %v198 = vld [vmem:[%s166 + $0x48] sm:$0xff]
        %v199 = vld [vmem:[%s166 + $0x50] sm:$0xff]
        %v200 = vld [vmem:[%s166 + $0x58] sm:$0xff]
        %v201 = vmul.f32 %v189, %v189
        %v202 = vmul.f32 %v190, %v190
        %v203 = vmul.f32 %v191, %v191
        %v204 = vmul.f32 %v192, %v192
        %v205 = vmul.f32 %v193, %v193
        %v206 = vmul.f32 %v194, %v194
        %v207 = vmul.f32 %v195, %v195
        %v208 = vmul.f32 %v196, %v196
        %v209 = vmul.f32 %v197, %v197
        %v210 = vmul.f32 %v198, %v198
        %v211 = vmul.f32 %v199, %v199
        %v212 = vmul.f32 %v200, %v200
        %v213 = vadd.f32 %v201, %v204
        %v214 = vadd.f32 %v213, %v207
        %v215 = vadd.f32 %v214, %v210
        %v216 = vrot.slane %v215, 4
        %v217 = vadd.f32 %v215, %v216
        %v218 = vrot.slane %v217, 2
        %v219 = vadd.f32 %v217, %v218
        %v220 = vrot.slane %v219, 1
        %v221 = vadd.f32 %v219, %v220
        %v222 = vadd.f32 %v202, %v205
        %v223 = vadd.f32 %v222, %v208
        %v224 = vadd.f32 %v223, %v211
        %v225 = vrot.slane %v224, 4
        %v226 = vadd.f32 %v224, %v225
        %v227 = vrot.slane %v226, 2
        %v228 = vadd.f32 %v226, %v227
        %v229 = vrot.slane %v228, 1
        %v230 = vadd.f32 %v228, %v229
        %v231 = vadd.f32 %v203, %v206
        %v232 = vadd.f32 %v231, %v209
        %v233 = vadd.f32 %v232, %v212
        %v234 = vrot.slane %v233, 4
        %v235 = vadd.f32 %v233, %v234
        %v236 = vrot.slane %v235, 2
        %v237 = vadd.f32 %v235, %v236
        %v238 = vrot.slane %v237, 1
        %v239 = vadd.f32 %v237, %v238
        %241 = vrot.lane.b32.xlu0 %v221, 80
        %v242 = vpop.permute.xlu0 %241
        %v244 = vadd.f32 %v221, %v242
        %246 = vrot.lane.b32.xlu0 %v221, 32
        %v247 = vpop.permute.xlu0 %246
        %248 = vrot.lane.b32.xlu0 %v230, 32
        %v249 = vpop.permute.xlu0 %248
        %vm250 = vcmask 261120
        %v251 = vsel %vm250, %v247, %v249
        %v253 = vadd.f32 %v244, %v251
        %254 = vrot.lane.b32.xlu0 %v230, 112
        %v255 = vpop.permute.xlu0 %254
        %v257 = vadd.f32 %v253, %v255
        %258 = vrot.lane.b32.xlu0 %v230, 64
        %v259 = vpop.permute.xlu0 %258
        %v261 = vadd.f32 %v257, %v259
        %263 = vrot.lane.b32.xlu0 %v230, 16
        %v264 = vpop.permute.xlu0 %263
        %265 = vrot.lane.b32.xlu0 %v239, 16
        %v266 = vpop.permute.xlu0 %265
        %vm267 = vcmask 130048
        %v268 = vsel %vm267, %v264, %v266
        %v270 = vadd.f32 %v261, %v268
        %271 = vrot.lane.b32.xlu0 %v239, 96
        %v272 = vpop.permute.xlu0 %271
        %v274 = vadd.f32 %v270, %v272
        %275 = vrot.lane.b32.xlu0 %v239, 48
        %v276 = vpop.permute.xlu0 %275
        %v278 = vadd.f32 %v274, %v276
        %v279 = vrsqrt.pop %v278
        %v280 = vmul.f32 %v278, %v279
        %vm281 = vcmp.eq.f32.partialorder %v278, inf
        %v282 = vsel %vm281, %v278, %v280
        %vm283 = vcmp.eq.f32.partialorder %v278, 0.0
        %v284 = vand.u32 %v278, 2147483648
        %v285 = vsel %vm283, %v284, %v282
        %vm286 = vcmask 385024
        %v287 = vsel %vm286, %v285, 0.0
        %288 = vadd.xlane.f32.xlu0 %v287
        %v289 = vpop.xlane.xlu0 %288
        %v290 = vrcp.pop 48.0
        %v291 = vmul.f32 %v289, %v290
        %v292 = vadd.f32 %v291, 1e-06
        %v293 = vrcp.pop %v292
        %v294 = vmul.f32 %v285, %v293
        %v295 = vld [vmem:[%s1] sm:$0x1]
        %v296 = vld [vmem:[%s2] sm:$0x1]
        %v297 = vmul.f32 %v295, %v294
        %v298 = vadd.f32 %v297, 1.0
        %v300 = vlaneseq
        %v301 = vshrl.u32 %v300, 7
        %v302 = vsub.s32 0, %v301
        %v303 = vrot.slane %v298, %v302
        %304 = vrot.lane.b32.xlu0 %v303, 48
        %v305 = vpop.permute.xlu0 %304
        %307 = vrot.lane.b32.xlu0 %v303, 96
        %v308 = vpop.permute.xlu0 %307
        %310 = vrot.lane.b32.xlu0 %v303, 16
        %v311 = vpop.permute.xlu0 %310
        %313 = vrot.lane.b32.xlu0 %v303, 64
        %v314 = vpop.permute.xlu0 %313
        %316 = vrot.lane.b32.xlu0 %v303, 112
        %v317 = vpop.permute.xlu0 %316
        %319 = vrot.lane.b32.xlu0 %v303, 32
        %v320 = vpop.permute.xlu0 %319
        %322 = vrot.lane.b32.xlu0 %v303, 80
        %v323 = vpop.permute.xlu0 %322
        %vm325 = vcmask 392192
        %v326 = vsel %vm325, %v298, %v305
        %vm327 = vcmask 785408
        %v328 = vsel %vm327, %v326, %v308
        %v329 = vsel %vm267, %v308, %v311
        %vm330 = vcmask 523264
        %v331 = vsel %vm330, %v329, %v314
        %vm332 = vcmask 916480
        %v333 = vsel %vm332, %v331, %v317
        %v334 = vsel %vm250, %v317, %v320
        %vm335 = vcmask 654336
        %v336 = vsel %vm335, %v334, %v323
        %v338 = vlaneseq
        %v339 = vshrl.u32 %v338, 7
        %v340 = vsub.s32 0, %v339
        %v341 = vrot.slane %v296, %v340
        %342 = vrot.lane.b32.xlu0 %v341, 48
        %v343 = vpop.permute.xlu0 %342
        %345 = vrot.lane.b32.xlu0 %v341, 96
        %v346 = vpop.permute.xlu0 %345
        %348 = vrot.lane.b32.xlu0 %v341, 16
        %v349 = vpop.permute.xlu0 %348
        %351 = vrot.lane.b32.xlu0 %v341, 64
        %v352 = vpop.permute.xlu0 %351
        %354 = vrot.lane.b32.xlu0 %v341, 112
        %v355 = vpop.permute.xlu0 %354
        %357 = vrot.lane.b32.xlu0 %v341, 32
        %v358 = vpop.permute.xlu0 %357
        %360 = vrot.lane.b32.xlu0 %v341, 80
        %v361 = vpop.permute.xlu0 %360
        %v363 = vsel %vm325, %v296, %v343
        %v364 = vsel %vm327, %v363, %v346
        %v365 = vsel %vm267, %v346, %v349
        %v366 = vsel %vm330, %v365, %v352
        %v367 = vsel %vm332, %v366, %v355
        %v368 = vsel %vm250, %v355, %v358
        %v369 = vsel %vm335, %v368, %v361
        %v370 = vlaneseq
        %v371 = vshrl.u32 %v370, 7
        %v372 = vsub.s32 0, %v371
        %v373 = vrot.slane %v328, %v372
        %v374 = vlaneseq
        %v375 = vshrl.u32 %v374, 7
        %v376 = vsub.s32 0, %v375
        %v377 = vrot.slane %v333, %v376
        %v378 = vlaneseq
        %v379 = vshrl.u32 %v378, 7
        %v380 = vsub.s32 0, %v379
        %v381 = vrot.slane %v336, %v380
        %v382 = vmul.f32 %v189, %v373
        %v383 = vmul.f32 %v190, %v377
        %v384 = vmul.f32 %v191, %v381
        %v385 = vmul.f32 %v192, %v373
        %v386 = vmul.f32 %v193, %v377
        %v387 = vmul.f32 %v194, %v381
        %v388 = vmul.f32 %v195, %v373
        %v389 = vmul.f32 %v196, %v377
        %v390 = vmul.f32 %v197, %v381
        %v391 = vmul.f32 %v198, %v373
        %v392 = vmul.f32 %v199, %v377
        %v393 = vmul.f32 %v200, %v381
        %v394 = vlaneseq
        %v395 = vshrl.u32 %v394, 7
        %v396 = vsub.s32 0, %v395
        %v397 = vrot.slane %v364, %v396
        %v398 = vlaneseq
        %v399 = vshrl.u32 %v398, 7
        %v400 = vsub.s32 0, %v399
        %v401 = vrot.slane %v367, %v400
        %v402 = vlaneseq
        %v403 = vshrl.u32 %v402, 7
        %v404 = vsub.s32 0, %v403
        %v405 = vrot.slane %v369, %v404
        %v406 = vadd.f32 %v382, %v397
        %v407 = vadd.f32 %v383, %v401
        %v408 = vadd.f32 %v384, %v405
        %v409 = vadd.f32 %v385, %v397
        %v410 = vadd.f32 %v386, %v401
        %v411 = vadd.f32 %v387, %v405
        %v412 = vadd.f32 %v388, %v397
        %v413 = vadd.f32 %v389, %v401
        %v414 = vadd.f32 %v390, %v405
        %v415 = vadd.f32 %v391, %v397
        %v416 = vadd.f32 %v392, %v401
        %v417 = vadd.f32 %v393, %v405
        %418 = vst [vmem:[%s188] sm:$0xff] %v406
        %419 = vst [vmem:[%s188 + $0x8] sm:$0xff] %v407
        %420 = vst [vmem:[%s188 + $0x10] sm:$0xff] %v408
        %421 = vst [vmem:[%s188 + $0x18] sm:$0xff] %v409
        %422 = vst [vmem:[%s188 + $0x20] sm:$0xff] %v410
        %423 = vst [vmem:[%s188 + $0x28] sm:$0xff] %v411
        %424 = vst [vmem:[%s188 + $0x30] sm:$0xff] %v412
        %425 = vst [vmem:[%s188 + $0x38] sm:$0xff] %v413
        %426 = vst [vmem:[%s188 + $0x40] sm:$0xff] %v414
        %427 = vst [vmem:[%s188 + $0x48] sm:$0xff] %v415
        %428 = vst [vmem:[%s188 + $0x50] sm:$0xff] %v416
        %429 = vst [vmem:[%s188 + $0x58] sm:$0xff] %v417
        %s430 = sand.u32 %s96, 1
        %s431 = scalar_lea.sflag [#allocation4], %s430
        %s432 = sand.u32 %s96, 1
        %s433 = smul.addr %s432, 96
        %s434 = scalar_lea.vmem [#allocation5], %s433
        // Predicated region
        $region37: #{tpu_custom_call.1} parent=31 // pred_check
          %p435 = pneg %p106
        $region38: #{tpu_custom_call.1} parent=31 // pred_check_branch
          %437 = sbr.rel (%p435) target = $region40
        $region39: #{tpu_custom_call.1} parent=31 // pred_region
          %s439 = ssub.s32 1536, 1536
          %440 = vsyncadd %s431, %s439
          %s441 = smul.addr %s20, 12
          %s442 = smul.addr %s441, 128
          %s443 = scalar_lea.hbm %s3, %s442
          %s444 = sshll.u32 %s434, 4
          %s445 = int_to_ptr.vmem [resolvable:$true] %s444
          %450 = dma.vmem_to_hbm [thread:$0]  %s445, 1536, %s443, %s431, 384, 384, 24
        $region40: #{tpu_custom_call.1} parent=31 // pred_fallthru
          _
      $region32: #{tpu_custom_call.1} parent=5 // pred_fallthru
        _
      %p451 = scmp.le.s32.totalorder 2, %s15
      // Predicated region
      $region41: #{tpu_custom_call.1} parent=5 // pred_check
        %p452 = pneg %p451
      $region42: #{tpu_custom_call.1} parent=5 // pred_check_branch
        %454 = sbr.rel (%p452) target = $region44
      $region43: #{tpu_custom_call.1} parent=5 // pred_region
        %s455 = ssub.s32 %s15, 2
        // Predicated region
        $region45: #{tpu_custom_call.1} parent=43 // pred_check
          %p456 = pneg %p112
        $region46: #{tpu_custom_call.1} parent=43 // pred_check_branch
          %458 = sbr.rel (%p456) target = $region48
        $region47: #{tpu_custom_call.1} parent=43 // pred_region
          %s459 = sand.u32 %s97, 1
          %s460 = scalar_lea.sflag [#allocation4], %s459
          %s461 = sand.u32 %s97, 1
          %s462 = smul.addr %s461, 96
          %s463 = scalar_lea.vmem [#allocation5], %s462
          %464 = dma.done %s460, 1536
        $region48: #{tpu_custom_call.1} parent=43 // pred_fallthru
          _
      $region44: #{tpu_custom_call.1} parent=5 // pred_fallthru
        _
    $region6: #{tpu_custom_call.1} parent=1 // loop_footer
      %s19 = sadd.s32 1, %s15
    $region7: #{tpu_custom_call.1} parent=1 // loop_footer_branch
      %14 = sbr.rel target = $region3
    $region8: #{tpu_custom_call.1} parent=1 // loop_exit
      _
    %465 = vsyncpa [#allocation3], 1
    %s466 = scalar_lea.sflag [#allocation3], 1
    %467 = vsyncpa %s466, 1
    %468 = vsyncpa [#allocation4], 1
    %s469 = scalar_lea.sflag [#allocation4], 1
    %470 = vsyncpa %s469, 1

</llo_original>
